<compile_context>
chip_gen: v6e
topology: v6e:2x2x1
jax: 0.10.0
libtpu: 0.0.40
codegen_flags: <defaults>
</compile_context>

<pallas_src>
import jax
import jax.numpy as jnp
from jax.experimental import pallas as pl
from jax.experimental.pallas import tpu as pltpu

_LANE = 128
_MAX_LANE_WIDTH = 4096                   # widest lane-dense last dim considered
_TARGET_TILE_BYTES = 4 * 1024 * 1024     # single output stream, double-buffered
                                         # -> ~8 MiB live; fits every generation


def _ladj_zeros_kernel(ladj_ref):
    # Base-class Bijector default: volume-preserving log|det J| == 0.
    # TODO(synk): `_forward` is abstract in flowtorch's base Bijector (raises
    #             NotImplementedError); a concrete subclass would replace this
    #             zeros-fill with its transform's log-det math.
    ladj_ref[...] = jnp.zeros(ladj_ref.shape, ladj_ref.dtype)


def _plan_layout(total: int, itemsize: int):
    """Pick a lane-dense, sublane-aligned (rows, cols) layout for `total` elems.

    Returns (rows, cols) with cols % 128 == 0, rows % min_sub == 0 and
    rows * cols == total, or None if no such exact factorization exists.
    """
    min_sub = 8 * max(1, 4 // itemsize)   # dtype-aware sublane quantum
    if total % _LANE != 0:
        return None
    c = min(_MAX_LANE_WIDTH, (total // _LANE) * _LANE)
    while c >= _LANE:
        if total % c == 0 and (total // c) % min_sub == 0:
            return total // c, c
        c -= _LANE
    return None


def _pick_tile_rows(rows: int, cols: int, itemsize: int) -> int:
    """Largest sublane-aligned divisor of rows within the per-tile budget,
    preferring a grid of >= 2 steps so v7x's two TensorCores both get work."""
    min_sub = 8 * max(1, 4 // itemsize)
    budget_rows = max(min_sub,
                      (_TARGET_TILE_BYTES // (cols * itemsize)) // min_sub * min_sub)
    tile_rows = min(budget_rows, rows)
    while rows % tile_rows != 0:
        tile_rows -= min_sub              # terminates: min_sub divides rows
    if rows // tile_rows < 2 and rows >= 2 * min_sub:
        tr = (rows // 2) // min_sub * min_sub
        while tr >= min_sub and rows % tr != 0:
            tr -= min_sub
        if tr >= min_sub:
            tile_rows = tr
    return tile_rows


@jax.jit
def bijector_forward(x: jax.Array):
    """Returns (y, log_abs_det_jacobian) matching the base Bijector defaults.

    y == x (shape preserving), log|det J| == zeros_like(x).
    """
    orig_shape = x.shape
    dtype = x.dtype
    itemsize = jnp.dtype(dtype).itemsize

    total = 1
    for d in orig_shape:
        total *= d

    # y: identity transform -> return the input unchanged (zero HBM traffic).
    y = x

    layout = _plan_layout(total, itemsize)
    if layout is None:
        # Ragged / tiny shapes: a broadcast-zero in XLA is cheaper than padding
        # through HBM and re-slicing around a Pallas call.
        return y, jnp.zeros_like(x)

    rows, cols = layout
    tile_rows = _pick_tile_rows(rows, cols, itemsize)
    grid = (rows // tile_rows,)

    ladj2d = pl.pallas_call(
        _ladj_zeros_kernel,
        out_shape=jax.ShapeDtypeStruct((rows, cols), dtype),
        grid_spec=pltpu.PrefetchScalarGridSpec(
            num_scalar_prefetch=0,
            grid=grid,
            in_specs=[],                                   # zeros-fill: no inputs
            out_specs=pl.BlockSpec((tile_rows, cols), lambda i: (i, 0)),
        ),
        compiler_params=pltpu.CompilerParams(
            dimension_semantics=("parallel",),
            vmem_limit_bytes=32 * 1024 * 1024,
        ),
    )()

    ladj = ladj2d.reshape(orig_shape)
    return y, ladj


if __name__ == "__main__":
    key = jax.random.PRNGKey(0)
    # NCHW input, small shapes: batch=2, channels=4, spatial=16x16
    x = jax.random.normal(key, (2, 4, 16, 16), dtype=jnp.float32)

    y, ladj = bijector_forward(x)
    jax.block_until_ready((y, ladj))

    # Verify base-Bijector semantics: shape-preserving, volume-preserving.
    assert y.shape == x.shape and y.dtype == x.dtype
    assert ladj.shape == x.shape and ladj.dtype == x.dtype
    assert bool(jnp.all(y == x))
    assert bool(jnp.all(ladj == 0))

    print("KERNEL_OK")
</pallas_src>

<mosaic_0001>
module attributes {stable_mosaic.version = 11 : i64} {
  func.func @_ladj_zeros_kernel(%arg0: i32, %arg1: memref<8x256xf32, #tpu.memory_space<vmem>>) attributes {dimension_semantics = [#tpu.dimension_semantics<parallel>], iteration_bounds = array<i64: 1>, scalar_prefetch = 0 : i64, scratch_operands = 0 : i64, tpu.core_type = #tpu.core_type<tc>, window_params = [{transform_indices = @transform_0, window_bounds = array<i64: 8, 256>}]} {
    %cst = arith.constant 0.000000e+00 : f32
    %0 = vector.broadcast %cst : f32 to vector<8x256xf32>
    %c0 = arith.constant 0 : index
    %c0_0 = arith.constant 0 : index
    %1 = vector.load %arg1[%c0, %c0_0] : memref<8x256xf32, #tpu.memory_space<vmem>>, vector<8x256xf32>
    tpu.vector_store %arg1[%c0, %c0_0], %0 {strides = array<i32>} : memref<8x256xf32, #tpu.memory_space<vmem>>, vector<8x256xf32>,
    return
  }
  func.func @transform_0(%arg0: i32) -> (i32, i32) {
    %c0_i32 = arith.constant 0 : i32
    %c0_i32_0 = arith.constant 0 : i32
    return %arg0, %c0_i32 : i32, i32
  }
}

</mosaic_0001>

<llo_original>
// kernel: bijector_forward.1
$region0: #{bijector_forward.1}
  #allocation0 [shape = 'u32[]', space=smem, size = 0x4, offset = 0x4, fixed_abs, tag = 'smem constant byte address 0x4 - core index']
  #allocation1 [shape = 'u32[144,128]{1,0:T(1,128)}', space=vmem, size = 0x12000, scoped, tag = 'internal scratch']
  %s0 = inlined_call_operand.vmem [shape: f32[8,256], index: 0, kind: output, shape index: {}]
  %s1 = sld [smem:[#allocation0]]
  $region10: #{bijector_forward.1} parent=0
    _
  %s3 = ssub.s32 1, %s1
  %s4 = scalar_select 0, %s3, %s1
  %5 = vst [vmem:[%s0] sm:$0xff] 0.0
  %6 = vst [vmem:[%s0 + $0x8] sm:$0xff] 0.0
  // Predicated region
  $region2: #{bijector_forward.1} parent=0 // pred_check
    _
  $region3: #{bijector_forward.1} parent=0 // pred_check_branch
    %8 = sbr.rel (0) target = $region5
  $region4: #{bijector_forward.1} parent=0 // pred_region
    _
  $region5: #{bijector_forward.1} parent=0 // pred_fallthru
    _
  // Predicated region
  $region6: #{bijector_forward.1} parent=0 // pred_check
    _
  $region7: #{bijector_forward.1} parent=0 // pred_check_branch
    %10 = sbr.rel (0) target = $region9
  $region8: #{bijector_forward.1} parent=0 // pred_region
    _
  $region9: #{bijector_forward.1} parent=0 // pred_fallthru
    _

</llo_original>
